<compile_context>
chip_gen: v7x
topology: tpu7x:2x2x1
jax: 0.10.0
libtpu: 0.0.40
codegen_flags: <defaults>
</compile_context>

<pallas_src>
import numpy as np
import jax
import jax.numpy as jnp
from jax.experimental import pallas as pl
from jax.experimental.pallas import tpu as pltpu


# ----------------------------------------------------------------------------
# Small helpers
# ----------------------------------------------------------------------------
def _tile_lanes(x, reps):
    """Replicate x along the last (lane) axis `reps` times via log-doubling."""
    out = x
    have = 1
    while have * 2 <= reps:
        out = jnp.concatenate([out, out], axis=-1)
        have *= 2
    if have < reps:
        out = jnp.concatenate([out, _tile_lanes(x, reps - have)], axis=-1)
    return out


# ----------------------------------------------------------------------------
# Pallas kernel
# ----------------------------------------------------------------------------
def condition_lu_kernel(g_ref, e1_ref, r_ref, um_ref, ds_ref, f_ref, out_ref):
    """out[n, a*C+d] = (w_p @ L_n @ U_n)[a, d] for one tile of batch rows.

    g_ref  : (2*CC, C*CC) fold of w_p & l_mask (zero rows on the w_u lanes).
    e1_ref : (1, C*CC)    fold of w_p @ l_eye, replicated over d.
    r_ref  : (2*CC, C*CC) 0/1 replication matrix for U (zero rows on w_l lanes).
    um_ref : (1, 2*CC)    [0 | u_mask] on the [w_l | w_u] lane slab.
    ds_ref : (1, 2*CC)    [0 | diag(s_sign)] on the same slab.
    f_ref  : (tn, 2*CC+C) feature tile.
    out_ref: (tn, CC)     flat output tile (row-major (a, d)).
    """
    CC = out_ref.shape[-1]            # C*C
    C = g_ref.shape[-1] // CC         # in_channel

    f = f_ref[...]
    if f.dtype != jnp.float32:        # accept bf16/other features, upcast here
        f = f.astype(jnp.float32)

    f128 = f[:, : 2 * CC]             # [w_l | w_u] lanes; lane-tile aligned slice
    ws = f[:, 2 * CC: 2 * CC + C]     # (tn, C)

    # A_all[n, c*CC + a*C + d] = (w_p @ L_n)[a, c]  (constant over d)
    a_all = jnp.dot(f128, g_ref[...], preferred_element_type=jnp.float32)
    a_all = a_all + e1_ref[...]

    # u128[n, CC + c*C + d] = U_n[c, d]; lanes < CC are zero.
    exp_t = _tile_lanes(jnp.exp(ws), 2 * C)          # (tn, 2*CC), period C
    u128 = f128 * um_ref[...] + ds_ref[...] * exp_t

    # B_all[n, c*CC + a*C + d] = U_n[c, d]  (replicated over a via 0/1 matmul)
    b_all = jnp.dot(u128, r_ref[...], preferred_element_type=jnp.float32)

    # Elementwise product, then reduce over the C contiguous groups of width CC.
    p = a_all * b_all                                 # (tn, C*CC)
    if C & (C - 1) == 0:
        width = C * CC
        while width > CC:
            half = width // 2
            p = p[:, :half] + p[:, half:]
            width = half
    else:                                             # generic (non power-of-2) C
        acc = p[:, :CC]
        for c in range(1, C):
            acc = acc + p[:, c * CC:(c + 1) * CC]
        p = acc

    out_ref[...] = p.astype(out_ref.dtype)


# ----------------------------------------------------------------------------
# Constant folding of the fixed buffers (once, at trace time, in numpy)
# ----------------------------------------------------------------------------
def _fold_constants(w_p, l_mask, u_mask, l_eye, s_sign):
    wp = np.asarray(w_p, np.float64)
    lm = np.asarray(l_mask, np.float64)
    um = np.asarray(u_mask, np.float64)
    ey = np.asarray(l_eye, np.float64)
    ss = np.asarray(s_sign, np.float64).reshape(-1)
    C = wp.shape[0]
    CC = C * C

    # G_big[k = b*C + cp, c*CC + a*C + d] = w_p[a,b] * l_mask[b,c] * (cp == c)
    # (rows CC..2*CC-1, i.e. the w_u lanes of the feature slab, stay zero).
    G = np.zeros((C, C, C, C, C), np.float64)         # (b, cp, c, a, d)
    for c in range(C):
        G[:, c, c, :, :] = (wp.T * lm[:, c:c + 1])[:, :, None]
    g_big = np.zeros((2 * CC, C * CC), np.float64)
    g_big[:CC, :] = G.reshape(CC, C * CC)

    # E1[c*CC + a*C + d] = (w_p @ l_eye)[a, c]        (constant over d)
    wpe = wp @ ey
    e1 = np.ascontiguousarray(
        np.broadcast_to(wpe.T[:, :, None], (C, C, C))).reshape(1, C * CC)

    # R[k = CC + c*C + d, c*CC + a*C + d] = 1         (replicate U over a)
    R = np.zeros((2 * CC, C, C, C), np.float64)       # (k, c, a, d)
    for c in range(C):
        for d in range(C):
            R[CC + c * C + d, c, :, d] = 1.0
    r_rep = R.reshape(2 * CC, C * CC)

    # Masks applied to the full [w_l | w_u] lane slab (w_l lanes zeroed).
    um128 = np.concatenate([np.zeros(CC), um.reshape(-1)]).reshape(1, 2 * CC)
    ds128 = np.concatenate(
        [np.zeros(CC), (np.eye(C) * ss[None, :]).reshape(-1)]).reshape(1, 2 * CC)

    def to32(x):
        return jnp.asarray(np.ascontiguousarray(x), dtype=jnp.float32)

    return to32(g_big), to32(e1), to32(r_rep), to32(um128), to32(ds128)


# ----------------------------------------------------------------------------
# Wrapper
# ----------------------------------------------------------------------------
def condition_lu_forward(feature, w_p, l_mask, u_mask, l_eye, s_sign, *, tn=2048):
    N, F = feature.shape
    C = int(w_p.shape[0])
    CC = C * C
    assert F == 2 * CC + C

    g_big, e1, r_rep, um128, ds128 = _fold_constants(
        w_p, l_mask, u_mask, l_eye, s_sign)

    # Batch tile: multiple of 8.  Keep at least 2 grid steps when N allows so a
    # v7x chip can spread the "parallel" axis over both TensorCores.  No HBM
    # padding: the ragged last block is masked on writeback by Pallas.
    tn = max(8, (int(tn) // 8) * 8)
    half_rows = max(8, (((N + 1) // 2) + 7) // 8 * 8)
    tn = min(tn, half_rows)
    steps = (N + tn - 1) // tn

    grid_spec = pltpu.PrefetchScalarGridSpec(
        num_scalar_prefetch=0,
        grid=(steps,),
        in_specs=[
            pl.BlockSpec((2 * CC, C * CC), lambda i: (0, 0)),   # G_big
            pl.BlockSpec((1, C * CC), lambda i: (0, 0)),        # E1
            pl.BlockSpec((2 * CC, C * CC), lambda i: (0, 0)),   # R (replication)
            pl.BlockSpec((1, 2 * CC), lambda i: (0, 0)),        # [0 | u_mask]
            pl.BlockSpec((1, 2 * CC), lambda i: (0, 0)),        # [0 | diag(s_sign)]
            pl.BlockSpec((tn, F), lambda i: (i, 0)),            # feature tile
        ],
        out_specs=pl.BlockSpec((tn, CC), lambda i: (i, 0)),
    )

    feat_itemsize = jnp.dtype(feature.dtype).itemsize
    const_bytes = (2 * (2 * CC) * C * CC + 2 * C * CC + 4 * CC) * 4
    cost = pl.CostEstimate(
        flops=2 * N * (2 * CC) * (C * CC) * 2 + 8 * N * C * CC,
        transcendentals=N * C,
        bytes_accessed=N * (F * feat_itemsize + CC * 4) + const_bytes,
    )

    out_flat = pl.pallas_call(
        condition_lu_kernel,
        out_shape=jax.ShapeDtypeStruct((N, CC), jnp.float32),
        grid_spec=grid_spec,
        compiler_params=pltpu.CompilerParams(
            dimension_semantics=("parallel",),
            vmem_limit_bytes=48 * 1024 * 1024,
        ),
        cost_estimate=cost,
    )(g_big, e1, r_rep, um128, ds128, feature)

    return out_flat.reshape(N, C, C)


# ----------------------------------------------------------------------------
# Deterministic parameter construction (mirrors ConditionLU.__init__), numpy-only
# ----------------------------------------------------------------------------
def _lu_numpy(a):
    """Partial-pivoting LU.  Returns (P, L, U) with a = P @ L @ U."""
    a = np.array(a, dtype=np.float64)
    n = a.shape[0]
    perm = np.arange(n)
    L = np.eye(n)
    U = a.copy()
    for k in range(n - 1):
        piv = k + int(np.argmax(np.abs(U[k:, k])))
        if piv != k:
            U[[k, piv], :] = U[[piv, k], :]
            L[[k, piv], :k] = L[[piv, k], :k]
            perm[[k, piv]] = perm[[piv, k]]
        for i in range(k + 1, n):
            L[i, k] = U[i, k] / U[k, k]
            U[i, k:] = U[i, k:] - L[i, k] * U[k, k:]
            U[i, k] = 0.0
    P = np.zeros((n, n))
    P[perm, np.arange(n)] = 1.0
    return P, L, U


def make_condition_lu_buffers(in_channel):
    rng = np.random.default_rng(0)
    weight = rng.standard_normal((in_channel, in_channel))
    q, _ = np.linalg.qr(weight)
    P, _, U = _lu_numpy(q)
    s_sign = np.sign(np.diag(U))
    u_mask = np.triu(np.ones((in_channel, in_channel)), 1)
    l_mask = u_mask.T
    l_eye = np.eye(in_channel)

    def f32(x):
        return jnp.asarray(np.ascontiguousarray(x), dtype=jnp.float32)

    return f32(P), f32(l_mask), f32(u_mask), f32(l_eye), f32(s_sign)


# ----------------------------------------------------------------------------
# Pure-JAX reference (mirrors ConditionLU.forward)
# ----------------------------------------------------------------------------
def condition_lu_reference(feature, w_p, l_mask, u_mask, l_eye, s_sign):
    C = w_p.shape[0]
    w_l = feature[:, :C * C].reshape(-1, C, C)
    w_u = feature[:, C * C:2 * C * C].reshape(-1, C, C)
    w_s = feature[:, 2 * C * C:]
    L = w_l * l_mask + l_eye
    U = w_u * u_mask + jnp.diag(s_sign) * jnp.exp(w_s)[:, None, :]
    return jnp.einsum('ab,nbc,ncd->nad', w_p, L, U,
                      precision=jax.lax.Precision.HIGHEST)


if __name__ == "__main__":
    C = 8                        # in_channel
    N = 40                       # batch (deliberately not a multiple of the tile)
    feat_dim = 2 * C * C + C     # 136

    w_p, l_mask, u_mask, l_eye, s_sign = make_condition_lu_buffers(C)

    key = jax.random.PRNGKey(0)
    feature = jax.random.normal(key, (N, feat_dim), dtype=jnp.float32)

    ref = jax.block_until_ready(
        condition_lu_reference(feature, w_p, l_mask, u_mask, l_eye, s_sign))

    # Small explicit tile: multi-step grid with a ragged last block.
    out_small = jax.block_until_ready(
        condition_lu_forward(feature, w_p, l_mask, u_mask, l_eye, s_sign, tn=16))
    np.testing.assert_allclose(np.asarray(out_small), np.asarray(ref),
                               rtol=1e-4, atol=1e-4)

    # Default (large) tile path (capped so the grid still has >= 2 steps).
    out_big = jax.block_until_ready(
        condition_lu_forward(feature, w_p, l_mask, u_mask, l_eye, s_sign))
    np.testing.assert_allclose(np.asarray(out_big), np.asarray(ref),
                               rtol=1e-4, atol=1e-4)

    print("KERNEL_OK")
</pallas_src>

<mosaic_0001>
module attributes {stable_mosaic.version = 11 : i64} {
  func.func @condition_lu_kernel(%arg0: i32, %arg1: memref<128x512xf32, #tpu.memory_space<vmem>>, %arg2: memref<1x512xf32, #tpu.memory_space<vmem>>, %arg3: memref<128x512xf32, #tpu.memory_space<vmem>>, %arg4: memref<1x128xf32, #tpu.memory_space<vmem>>, %arg5: memref<1x128xf32, #tpu.memory_space<vmem>>, %arg6: memref<16x136xf32, #tpu.memory_space<vmem>>, %arg7: memref<16x64xf32, #tpu.memory_space<vmem>>) attributes {dimension_semantics = [#tpu.dimension_semantics<parallel>], iteration_bounds = array<i64: 3>, scalar_prefetch = 0 : i64, scratch_operands = 0 : i64, tpu.core_type = #tpu.core_type<tc>, window_params = [{pipeline_mode = #tpu.pipeline_mode<synchronous>, transform_indices = @transform_0, window_bounds = array<i64: 128, 512>}, {pipeline_mode = #tpu.pipeline_mode<synchronous>, transform_indices = @transform_1, window_bounds = array<i64: 1, 512>}, {pipeline_mode = #tpu.pipeline_mode<synchronous>, transform_indices = @transform_2, window_bounds = array<i64: 128, 512>}, {pipeline_mode = #tpu.pipeline_mode<synchronous>, transform_indices = @transform_3, window_bounds = array<i64: 1, 128>}, {pipeline_mode = #tpu.pipeline_mode<synchronous>, transform_indices = @transform_4, window_bounds = array<i64: 1, 128>}, {transform_indices = @transform_5, window_bounds = array<i64: 16, 136>}, {transform_indices = @transform_6, window_bounds = array<i64: 16, 64>}]} {
    %c0 = arith.constant 0 : index
    %c0_0 = arith.constant 0 : index
    %0 = vector.load %arg6[%c0, %c0_0] : memref<16x136xf32, #tpu.memory_space<vmem>>, vector<16x136xf32>
    %1 = vector.extract_strided_slice %0 {offsets = [0, 0], sizes = [16, 128], strides = [1, 1]} : vector<16x136xf32> to vector<16x128xf32>
    %2 = vector.extract_strided_slice %0 {offsets = [0, 128], sizes = [16, 8], strides = [1, 1]} : vector<16x136xf32> to vector<16x8xf32>
    %c0_1 = arith.constant 0 : index
    %c0_2 = arith.constant 0 : index
    %3 = vector.load %arg1[%c0_1, %c0_2] : memref<128x512xf32, #tpu.memory_space<vmem>>, vector<128x512xf32>
    %cst = arith.constant dense<0.000000e+00> : vector<16x512xf32>
    %4 = tpu.matmul %1, %3, %cst {dimension_numbers = #tpu.dot_dimension_numbers<[1], [0], [0], [1], [0, 0, 1, 1], [], []>} : vector<16x128xf32>, vector<128x512xf32>, vector<16x512xf32> -> vector<16x512xf32>
    %c0_3 = arith.constant 0 : index
    %c0_4 = arith.constant 0 : index
    %5 = vector.load %arg2[%c0_3, %c0_4] : memref<1x512xf32, #tpu.memory_space<vmem>>, vector<1x512xf32>
    %6 = vector.broadcast %5 : vector<1x512xf32> to vector<16x512xf32>
    %7 = arith.addf %4, %6 : vector<16x512xf32>
    %8 = math.exp %2 : vector<16x8xf32>
    %9 = tpu.concatenate %8, %8 in 1 : vector<16x8xf32>, vector<16x8xf32> -> vector<16x16xf32>
    %10 = tpu.concatenate %9, %9 in 1 : vector<16x16xf32>, vector<16x16xf32> -> vector<16x32xf32>
    %11 = tpu.concatenate %10, %10 in 1 : vector<16x32xf32>, vector<16x32xf32> -> vector<16x64xf32>
    %12 = tpu.concatenate %11, %11 in 1 : vector<16x64xf32>, vector<16x64xf32> -> vector<16x128xf32>
    %c0_5 = arith.constant 0 : index
    %c0_6 = arith.constant 0 : index
    %13 = vector.load %arg4[%c0_5, %c0_6] : memref<1x128xf32, #tpu.memory_space<vmem>>, vector<1x128xf32>
    %14 = vector.broadcast %13 : vector<1x128xf32> to vector<16x128xf32>
    %15 = arith.mulf %1, %14 : vector<16x128xf32>
    %c0_7 = arith.constant 0 : index
    %c0_8 = arith.constant 0 : index
    %16 = vector.load %arg5[%c0_7, %c0_8] : memref<1x128xf32, #tpu.memory_space<vmem>>, vector<1x128xf32>
    %17 = vector.broadcast %16 : vector<1x128xf32> to vector<16x128xf32>
    %18 = arith.mulf %17, %12 : vector<16x128xf32>
    %19 = arith.addf %15, %18 : vector<16x128xf32>
    %c0_9 = arith.constant 0 : index
    %c0_10 = arith.constant 0 : index
    %20 = vector.load %arg3[%c0_9, %c0_10] : memref<128x512xf32, #tpu.memory_space<vmem>>, vector<128x512xf32>
    %cst_11 = arith.constant dense<0.000000e+00> : vector<16x512xf32>
    %21 = tpu.matmul %19, %20, %cst_11 {dimension_numbers = #tpu.dot_dimension_numbers<[1], [0], [0], [1], [0, 0, 1, 1], [], []>} : vector<16x128xf32>, vector<128x512xf32>, vector<16x512xf32> -> vector<16x512xf32>
    %22 = arith.mulf %7, %21 : vector<16x512xf32>
    %23 = vector.extract_strided_slice %22 {offsets = [0, 0], sizes = [16, 256], strides = [1, 1]} : vector<16x512xf32> to vector<16x256xf32>
    %24 = vector.extract_strided_slice %22 {offsets = [0, 256], sizes = [16, 256], strides = [1, 1]} : vector<16x512xf32> to vector<16x256xf32>
    %25 = arith.addf %23, %24 : vector<16x256xf32>
    %26 = vector.extract_strided_slice %25 {offsets = [0, 0], sizes = [16, 128], strides = [1, 1]} : vector<16x256xf32> to vector<16x128xf32>
    %27 = vector.extract_strided_slice %25 {offsets = [0, 128], sizes = [16, 128], strides = [1, 1]} : vector<16x256xf32> to vector<16x128xf32>
    %28 = arith.addf %26, %27 : vector<16x128xf32>
    %29 = vector.extract_strided_slice %28 {offsets = [0, 0], sizes = [16, 64], strides = [1, 1]} : vector<16x128xf32> to vector<16x64xf32>
    %30 = vector.extract_strided_slice %28 {offsets = [0, 64], sizes = [16, 64], strides = [1, 1]} : vector<16x128xf32> to vector<16x64xf32>
    %31 = arith.addf %29, %30 : vector<16x64xf32>
    %c0_12 = arith.constant 0 : index
    %c0_13 = arith.constant 0 : index
    %32 = vector.load %arg7[%c0_12, %c0_13] : memref<16x64xf32, #tpu.memory_space<vmem>>, vector<16x64xf32>
    tpu.vector_store %arg7[%c0_12, %c0_13], %31 {strides = array<i32>} : memref<16x64xf32, #tpu.memory_space<vmem>>, vector<16x64xf32>,
    return
  }
  func.func @transform_0(%arg0: i32) -> (i32, i32) {
    %c0_i32 = arith.constant 0 : i32
    %c0_i32_0 = arith.constant 0 : i32
    %c0_i32_1 = arith.constant 0 : i32
    return %c0_i32, %c0_i32_0 : i32, i32
  }
  func.func @transform_1(%arg0: i32) -> (i32, i32) {
    %c0_i32 = arith.constant 0 : i32
    %c0_i32_0 = arith.constant 0 : i32
    %c0_i32_1 = arith.constant 0 : i32
    return %c0_i32, %c0_i32_0 : i32, i32
  }
  func.func @transform_2(%arg0: i32) -> (i32, i32) {
    %c0_i32 = arith.constant 0 : i32
    %c0_i32_0 = arith.constant 0 : i32
    %c0_i32_1 = arith.constant 0 : i32
    return %c0_i32, %c0_i32_0 : i32, i32
  }
  func.func @transform_3(%arg0: i32) -> (i32, i32) {
    %c0_i32 = arith.constant 0 : i32
    %c0_i32_0 = arith.constant 0 : i32
    %c0_i32_1 = arith.constant 0 : i32
    return %c0_i32, %c0_i32_0 : i32, i32
  }
  func.func @transform_4(%arg0: i32) -> (i32, i32) {
    %c0_i32 = arith.constant 0 : i32
    %c0_i32_0 = arith.constant 0 : i32
    %c0_i32_1 = arith.constant 0 : i32
    return %c0_i32, %c0_i32_0 : i32, i32
  }
  func.func @transform_5(%arg0: i32) -> (i32, i32) {
    %c0_i32 = arith.constant 0 : i32
    %c0_i32_0 = arith.constant 0 : i32
    return %arg0, %c0_i32 : i32, i32
  }
  func.func @transform_6(%arg0: i32) -> (i32, i32) {
    %c0_i32 = arith.constant 0 : i32
    %c0_i32_0 = arith.constant 0 : i32
    return %arg0, %c0_i32 : i32, i32
  }
}

</mosaic_0001>

<llo_original>
// kernel: tpu_custom_call.1
$region0: #{tpu_custom_call.1}
  #allocation0 [shape = 'u32[]', space=smem, size = 0x4, offset = 0x4, fixed_abs, tag = 'smem constant byte address 0x4 - core index']
  #allocation1 [shape = 'u32[144,128]{1,0:T(1,128)}', space=vmem, size = 0x12000, scoped, tag = 'internal scratch']
  %s0 = inlined_call_operand.hbm [shape: f32[128,512], index: 0, kind: input, shape index: {}]
  %s1 = inlined_call_operand.hbm [shape: f32[1,512], index: 1, kind: input, shape index: {}]
  %s2 = inlined_call_operand.hbm [shape: f32[128,512], index: 2, kind: input, shape index: {}]
  %s3 = inlined_call_operand.vmem [shape: f32[1,128], index: 3, kind: input, shape index: {}]
  %s4 = inlined_call_operand.vmem [shape: f32[1,128], index: 4, kind: input, shape index: {}]
  %s5 = inlined_call_operand.hbm [shape: f32[40,136], index: 5, kind: input, shape index: {}]
  %s6 = inlined_call_operand.hbm [shape: f32[40,64], index: 6, kind: output, shape index: {}]
  %s7 = sld [smem:[#allocation0]]
  $region73: #{tpu_custom_call.1} parent=0
    _
  %s9 = ssub.s32 1, %s7
  %s10 = scalar_select 0, %s9, %s7
  $region1: #{tpu_custom_call.1} parent=0
    #allocation2 [shape = 'u8[262144]{0}', space=vmem, size = 0x40000, scoped, tag = 'input window, operand 0, single buffered']
    #allocation3 [shape = 's32[2]{0}', space=sflag, size = 0x8, scoped, tag = 'scoped memory for tpu_custom_call.1']
    #allocation4 [shape = 's32[2]{0}', space=sflag, size = 0x8, scoped, tag = 'scoped memory for tpu_custom_call.1']
    #allocation5 [shape = 'u8[2048]{0}', space=vmem, size = 0x800, scoped, tag = 'input window, operand 1, single buffered']
    #allocation6 [shape = 's32[1]{0}', space=sflag, size = 0x4, scoped, tag = 'scoped memory for tpu_custom_call.1']
    #allocation7 [shape = 'u8[262144]{0}', space=vmem, size = 0x40000, scoped, tag = 'input window, operand 2, single buffered']
    #allocation8 [shape = 'u8[32768]{0}', space=vmem, size = 0x8000, scoped, tag = 'input window, operand 5']
    #allocation9 [shape = 's32[2]{0}', space=sflag, size = 0x8, scoped, tag = 'scoped memory for tpu_custom_call.1']
    #allocation10 [shape = 'u8[16384]{0}', space=vmem, size = 0x4000, scoped, tag = 'output window, operand 0']
    %11 = vsyncpa [#allocation3], 0
    %12 = vsyncpa [#allocation6], 0
    %13 = vsyncpa [#allocation9], 0
    %s14 = scalar_lea.sflag [#allocation9], 1
    %15 = vsyncpa %s14, 0
    %16 = vsyncpa [#allocation4], 0
    %s17 = scalar_lea.sflag [#allocation4], 1
    %18 = vsyncpa %s17, 0
    loop: start=0, step=1, limit=5
    $region2: #{tpu_custom_call.1} parent=1 // loop_pre_header
      _
    $region3: #{tpu_custom_call.1} parent=1 // loop_header
      %s20 = sphi 0, %s24
      %p21 = scmp.ge.s32.totalorder %s20, 5
      %s28 = sphi 0, %s28
      %s30 = sphi 0, %s28
      %s31 = sphi 0, %s30
      %s45 = sphi 0, %s31
      %s49 = sphi 0, %s49
      %s51 = sphi 0, %s49
      %s52 = sphi 0, %s51
      %s66 = sphi 0, %s52
      %s70 = sphi 0, %s70
      %s72 = sphi 0, %s70
      %s73 = sphi 0, %s72
      %s87 = sphi 0, %s73
      %s91 = sphi 0, %s91
      %s93 = sphi 0, %s91
      %s94 = sphi 0, %s93
      %s108 = sphi 0, %s94
      %s112 = sphi 0, %s112
      %s114 = sphi 0, %s112
      %s115 = sphi 0, %s114
      %s129 = sphi 0, %s115
      %s135 = sphi 0, %s137
      %s138 = sphi 0, %s135
      %s139 = sphi 0, %s138
      %s155 = sphi 0, %s139
      %s161 = sphi 0, %s163
      %s164 = sphi 0, %s161
      %s165 = sphi 0, %s164
      %s181 = sphi 0, %s165
    $region4: #{tpu_custom_call.1} parent=1 // loop_header_branch
      %23 = sbr.rel (%p21) target = $region8
    $region5: #{tpu_custom_call.1} parent=1 // loop_body
      %s25 = ssub.s32 %s20, 1
      %s26 = ssub.s32 %s20, 2
      %s27 = sadd.s32 %s20, 1
      %s29 = sadd.s32 %s28, 1
      %p32 = scmp.eq.s32.totalorder %s20, 2
      %p33 = scmp.ne.s32.totalorder %s28, %s30
      %p34 = scmp.eq.s32.totalorder %s20, 0
      %p35 = por %p33, %p34
      %p36 = scmp.ne.s32.totalorder %s28, %s30
      %p37 = scmp.eq.s32.totalorder %s25, 2
      %p38 = por %p36, %p37
      %p39 = scmp.ne.s32.totalorder %s30, %s31
      %p40 = scmp.eq.s32.totalorder %s25, 0
      %p41 = por %p39, %p40
      %p42 = scmp.ne.s32.totalorder %s30, %s31
      %p43 = scmp.eq.s32.totalorder %s26, 2
      %p44 = por %p42, %p43
      %p46 = scmp.ne.s32.totalorder %s31, %s45
      %p47 = scmp.eq.s32.totalorder %s26, 0
      %p48 = por %p46, %p47
      %s50 = sadd.s32 %s49, 1
      %p53 = scmp.eq.s32.totalorder %s20, 2
      %p54 = scmp.ne.s32.totalorder %s49, %s51
      %p55 = scmp.eq.s32.totalorder %s20, 0
      %p56 = por %p54, %p55
      %p57 = scmp.ne.s32.totalorder %s49, %s51
      %p58 = scmp.eq.s32.totalorder %s25, 2
      %p59 = por %p57, %p58
      %p60 = scmp.ne.s32.totalorder %s51, %s52
      %p61 = scmp.eq.s32.totalorder %s25, 0
      %p62 = por %p60, %p61
      %p63 = scmp.ne.s32.totalorder %s51, %s52
      %p64 = scmp.eq.s32.totalorder %s26, 2
      %p65 = por %p63, %p64
      %p67 = scmp.ne.s32.totalorder %s52, %s66
      %p68 = scmp.eq.s32.totalorder %s26, 0
      %p69 = por %p67, %p68
      %s71 = sadd.s32 %s70, 1
      %p74 = scmp.eq.s32.totalorder %s20, 2
      %p75 = scmp.ne.s32.totalorder %s70, %s72
      %p76 = scmp.eq.s32.totalorder %s20, 0
      %p77 = por %p75, %p76
      %p78 = scmp.ne.s32.totalorder %s70, %s72
      %p79 = scmp.eq.s32.totalorder %s25, 2
      %p80 = por %p78, %p79
      %p81 = scmp.ne.s32.totalorder %s72, %s73
      %p82 = scmp.eq.s32.totalorder %s25, 0
      %p83 = por %p81, %p82
      %p84 = scmp.ne.s32.totalorder %s72, %s73
      %p85 = scmp.eq.s32.totalorder %s26, 2
      %p86 = por %p84, %p85
      %p88 = scmp.ne.s32.totalorder %s73, %s87
      %p89 = scmp.eq.s32.totalorder %s26, 0
      %p90 = por %p88, %p89
      %s92 = sadd.s32 %s91, 1
      %p95 = scmp.eq.s32.totalorder %s20, 2
      %p96 = scmp.ne.s32.totalorder %s91, %s93
      %p97 = scmp.eq.s32.totalorder %s20, 0
      %p98 = por %p96, %p97
      %p99 = scmp.ne.s32.totalorder %s91, %s93
      %p100 = scmp.eq.s32.totalorder %s25, 2
      %p101 = por %p99, %p100
      %p102 = scmp.ne.s32.totalorder %s93, %s94
      %p103 = scmp.eq.s32.totalorder %s25, 0
      %p104 = por %p102, %p103
      %p105 = scmp.ne.s32.totalorder %s93, %s94
      %p106 = scmp.eq.s32.totalorder %s26, 2
      %p107 = por %p105, %p106
      %p109 = scmp.ne.s32.totalorder %s94, %s108
      %p110 = scmp.eq.s32.totalorder %s26, 0
      %p111 = por %p109, %p110
      %s113 = sadd.s32 %s112, 1
      %p116 = scmp.eq.s32.totalorder %s20, 2
      %p117 = scmp.ne.s32.totalorder %s112, %s114
      %p118 = scmp.eq.s32.totalorder %s20, 0
      %p119 = por %p117, %p118
      %p120 = scmp.ne.s32.totalorder %s112, %s114
      %p121 = scmp.eq.s32.totalorder %s25, 2
      %p122 = por %p120, %p121
      %p123 = scmp.ne.s32.totalorder %s114, %s115
      %p124 = scmp.eq.s32.totalorder %s25, 0
      %p125 = por %p123, %p124
      %p126 = scmp.ne.s32.totalorder %s114, %s115
      %p127 = scmp.eq.s32.totalorder %s26, 2
      %p128 = por %p126, %p127
      %p130 = scmp.ne.s32.totalorder %s115, %s129
      %p131 = scmp.eq.s32.totalorder %s26, 0
      %p132 = por %p130, %p131
      %s133 = ssub.s32 %s20, %s27
      %p134 = scmp.eq.s32.totalorder %s133, 0
      %s136 = sadd.s32 %s135, 1
      %s137 = scalar_select %p134, %s135, %s136
      %p140 = pneg %p134
      %p141 = scmp.eq.s32.totalorder %s20, 2
      %p142 = por %p140, %p141
      %p143 = scmp.ne.s32.totalorder %s135, %s138
      %p144 = scmp.eq.s32.totalorder %s20, 0
      %p145 = por %p143, %p144
      %p146 = scmp.ne.s32.totalorder %s135, %s138
      %p147 = scmp.eq.s32.totalorder %s25, 2
      %p148 = por %p146, %p147
      %p149 = scmp.ne.s32.totalorder %s138, %s139
      %p150 = scmp.eq.s32.totalorder %s25, 0
      %p151 = por %p149, %p150
      %p152 = scmp.ne.s32.totalorder %s138, %s139
      %p153 = scmp.eq.s32.totalorder %s26, 2
      %p154 = por %p152, %p153
      %p156 = scmp.ne.s32.totalorder %s139, %s155
      %p157 = scmp.eq.s32.totalorder %s26, 0
      %p158 = por %p156, %p157
      %s159 = ssub.s32 %s20, %s27
      %p160 = scmp.eq.s32.totalorder %s159, 0
      %s162 = sadd.s32 %s161, 1
      %s163 = scalar_select %p160, %s161, %s162
      %p166 = pneg %p160
      %p167 = scmp.eq.s32.totalorder %s20, 2
      %p168 = por %p166, %p167
      %p169 = scmp.ne.s32.totalorder %s161, %s164
      %p170 = scmp.eq.s32.totalorder %s20, 0
      %p171 = por %p169, %p170
      %p172 = scmp.ne.s32.totalorder %s161, %s164
      %p173 = scmp.eq.s32.totalorder %s25, 2
      %p174 = por %p172, %p173
      %p175 = scmp.ne.s32.totalorder %s164, %s165
      %p176 = scmp.eq.s32.totalorder %s25, 0
      %p177 = por %p175, %p176
      %p178 = scmp.ne.s32.totalorder %s164, %s165
      %p179 = scmp.eq.s32.totalorder %s26, 2
      %p180 = por %p178, %p179
      %p182 = scmp.ne.s32.totalorder %s165, %s181
      %p183 = scmp.eq.s32.totalorder %s26, 0
      %p184 = por %p182, %p183
      %p185 = scmp.le.s32.totalorder 1, %s20
      %p186 = scmp.lt.s32.totalorder %s20, 4
      %p187 = pnand %p185, %p186
      %p188 = pneg %p187
      // Predicated region
      $region9: #{tpu_custom_call.1} parent=5 // pred_check
        _
      $region10: #{tpu_custom_call.1} parent=5 // pred_check_branch
        %190 = sbr.rel (%p187) target = $region12
      $region11: #{tpu_custom_call.1} parent=5 // pred_region
        %s191 = ssub.s32 %s20, 1
        // Predicated region
        $region13: #{tpu_custom_call.1} parent=11 // pred_check
          %p192 = pneg %p41
        $region14: #{tpu_custom_call.1} parent=11 // pred_check_branch
          %194 = sbr.rel (%p192) target = $region16
        $region15: #{tpu_custom_call.1} parent=11 // pred_region
          %s196 = ssub.s32 8192, 8192
          %197 = vsyncadd [#allocation3], %s196
          %s198 = sshll.u32 [#allocation2], 4
          %s199 = int_to_ptr.vmem [resolvable:$true] %s198
          %204 = dma.hbm_to_vmem [thread:$0]  %s0, 8192, %s199, [#allocation3], 512, 512, 32
        $region16: #{tpu_custom_call.1} parent=11 // pred_fallthru
          _
        // Predicated region
        $region17: #{tpu_custom_call.1} parent=11 // pred_check
          %p205 = pneg %p62
        $region18: #{tpu_custom_call.1} parent=11 // pred_check_branch
          %207 = sbr.rel (%p205) target = $region20
        $region19: #{tpu_custom_call.1} parent=11 // pred_region
          %s209 = ssub.s32 64, 64
          %210 = vsyncadd [#allocation6], %s209
          %s212 = sshll.u32 [#allocation5], 4
          %s213 = int_to_ptr.vmem [resolvable:$true] %s212
          %215 = dma.hbm_to_vmem [thread:$0]  %s1, 64, %s213, [#allocation6]
        $region20: #{tpu_custom_call.1} parent=11 // pred_fallthru
          _
        // Predicated region
        $region21: #{tpu_custom_call.1} parent=11 // pred_check
          %p216 = pneg %p83
        $region22: #{tpu_custom_call.1} parent=11 // pred_check_branch
          %218 = sbr.rel (%p216) target = $region24
        $region23: #{tpu_custom_call.1} parent=11 // pred_region
          %s220 = ssub.s32 8192, 8192
          %221 = vsyncadd [#allocation6], %s220
          %s222 = sshll.u32 [#allocation7], 4
          %s223 = int_to_ptr.vmem [resolvable:$true] %s222
          %228 = dma.hbm_to_vmem [thread:$0]  %s2, 8192, %s223, [#allocation6], 512, 512, 32
        $region24: #{tpu_custom_call.1} parent=11 // pred_fallthru
          _
        // Predicated region
        $region25: #{tpu_custom_call.1} parent=11 // pred_check
          %p229 = pneg %p104
        $region26: #{tpu_custom_call.1} parent=11 // pred_check_branch
          %231 = sbr.rel (%p229) target = $region28
        $region27: #{tpu_custom_call.1} parent=11 // pred_region
          _
        $region28: #{tpu_custom_call.1} parent=11 // pred_fallthru
          _
        // Predicated region
        $region29: #{tpu_custom_call.1} parent=11 // pred_check
          %p232 = pneg %p125
        $region30: #{tpu_custom_call.1} parent=11 // pred_check_branch
          %234 = sbr.rel (%p232) target = $region32
        $region31: #{tpu_custom_call.1} parent=11 // pred_region
          _
        $region32: #{tpu_custom_call.1} parent=11 // pred_fallthru
          _
      $region12: #{tpu_custom_call.1} parent=5 // pred_fallthru
        _
      %p235 = scmp.lt.s32.totalorder %s20, 3
      // Predicated region
      $region33: #{tpu_custom_call.1} parent=5 // pred_check
        %p236 = pneg %p235
      $region34: #{tpu_custom_call.1} parent=5 // pred_check_branch
        %238 = sbr.rel (%p236) target = $region36
      $region35: #{tpu_custom_call.1} parent=5 // pred_region
        // Predicated region
        $region37: #{tpu_custom_call.1} parent=35 // pred_check
          %p239 = pneg %p145
        $region38: #{tpu_custom_call.1} parent=35 // pred_check_branch
          %241 = sbr.rel (%p239) target = $region40
        $region39: #{tpu_custom_call.1} parent=35 // pred_region
          %s242 = sand.u32 %s135, 1
          %s243 = scalar_lea.sflag [#allocation9], %s242
          %s244 = sand.u32 %s135, 1
          %s245 = smul.addr %s244, 32
          %s246 = scalar_lea.vmem [#allocation8], %s245
          %s247 = smul.u32 2, %s20
          %s248 = ssub.s32 5, %s247
          %p249 = scmp.lt.s32.totalorder %s248, 2
          %s250 = scalar_select %p249, %s248, 2
          %s251 = smul.u32 128, %s250
          %s252 = smul.u32 %s251, 2
          %s254 = ssub.s32 512, %s252
          %255 = vsyncadd %s243, %s254
          %p256 = scmp.ne.s32.totalorder 0, %s252
          %s257 = smul.addr %s247, 2
          %s258 = smul.addr %s257, 128
          %s259 = scalar_lea.hbm %s5, %s258
          %s260 = smul.u32 16, %s250
          %s261 = sshll.u32 %s246, 4
          %s262 = int_to_ptr.vmem [resolvable:$true] %s261
          %s263 = sshll.u32 %s260, 4
          %267 = dma.hbm_to_vmem [thread:$0]  (%p256), %s259, %s263, %s262, %s243, 256, 256, 16
        $region40: #{tpu_custom_call.1} parent=35 // pred_fallthru
          _
      $region36: #{tpu_custom_call.1} parent=5 // pred_fallthru
        _
      %p268 = scmp.le.s32.totalorder 1, %s20
      %p269 = scmp.lt.s32.totalorder %s20, 4
      %p270 = pnand %p268, %p269
      %p271 = pneg %p270
      // Predicated region
      $region41: #{tpu_custom_call.1} parent=5 // pred_check
        _
      $region42: #{tpu_custom_call.1} parent=5 // pred_check_branch
        %273 = sbr.rel (%p270) target = $region44
      $region43: #{tpu_custom_call.1} parent=5 // pred_region
        %s274 = ssub.s32 %s20, 1
        // Predicated region
        $region45: #{tpu_custom_call.1} parent=43 // pred_check
          %p275 = pneg %p41
        $region46: #{tpu_custom_call.1} parent=43 // pred_check_branch
          %277 = sbr.rel (%p275) target = $region48
        $region47: #{tpu_custom_call.1} parent=43 // pred_region
          %278 = dma.done [#allocation3], 8192
        $region48: #{tpu_custom_call.1} parent=43 // pred_fallthru
          _
        // Predicated region
        $region49: #{tpu_custom_call.1} parent=43 // pred_check
          %p279 = pneg %p62
        $region50: #{tpu_custom_call.1} parent=43 // pred_check_branch
          %281 = sbr.rel (%p279) target = $region52
        $region51: #{tpu_custom_call.1} parent=43 // pred_region
          %282 = dma.done [#allocation6], 64
        $region52: #{tpu_custom_call.1} parent=43 // pred_fallthru
          _
        // Predicated region
        $region53: #{tpu_custom_call.1} parent=43 // pred_check
          %p283 = pneg %p83
        $region54: #{tpu_custom_call.1} parent=43 // pred_check_branch
          %285 = sbr.rel (%p283) target = $region56
        $region55: #{tpu_custom_call.1} parent=43 // pred_region
          %286 = dma.done [#allocation6], 8192
        $region56: #{tpu_custom_call.1} parent=43 // pred_fallthru
          _
        %s287 = sand.u32 %s138, 1
        %s288 = scalar_lea.sflag [#allocation9], %s287
        %s289 = sand.u32 %s138, 1
        %s290 = smul.addr %s289, 32
        %s291 = scalar_lea.vmem [#allocation8], %s290
        // Predicated region
        $region57: #{tpu_custom_call.1} parent=43 // pred_check
          %p292 = pneg %p151
        $region58: #{tpu_custom_call.1} parent=43 // pred_check_branch
          %294 = sbr.rel (%p292) target = $region60
        $region59: #{tpu_custom_call.1} parent=43 // pred_region
          %295 = dma.done %s288, 512
        $region60: #{tpu_custom_call.1} parent=43 // pred_fallthru
          _
        %p296 = pneg %p41
        %p297 = pneg %p38
        %p298 = pneg %p62
        %p299 = pneg %p59
        %p300 = pneg %p83
        %p301 = pneg %p80
        %p302 = pneg %p104
        %p303 = pneg %p101
        %p304 = pneg %p125
        %p305 = pneg %p122
        %s306 = sand.u32 %s138, 1
        %s307 = scalar_lea.sflag [#allocation9], %s306
        %s308 = sand.u32 %s138, 1
        %s309 = smul.addr %s308, 32
        %s310 = scalar_lea.vmem [#allocation8], %s309
        %p311 = pneg %p151
        %p312 = pneg %p148
        %p313 = pneg %p177
        %p314 = pneg %p174
        %s315 = sand.u32 %s164, 1
        %s316 = scalar_lea.sflag [#allocation4], %s315
        %s317 = sand.u32 %s164, 1
        %s318 = smul.addr %s317, 16
        %s319 = scalar_lea.vmem [#allocation10], %s318
        %s320 = smul.u32 2, %s25
        %s321 = ssub.s32 5, %s320
        %p322 = scmp.lt.s32.totalorder %s321, 2
        %s323 = scalar_select %p322, %s321, 2
        %s324 = smul.u32 128, %s323
        %s325 = smul.u32 %s324, 2
        %s326 = smul.u32 2, %s25
        %s327 = ssub.s32 5, %s326
        %p328 = scmp.lt.s32.totalorder %s327, 2
        %s329 = scalar_select %p328, %s327, 2
        %s330 = smul.u32 128, %s329
        %v331 = vld [vmem:[%s291] sm:$0xff]
        %v332 = vld [vmem:[%s291 + $0x8] sm:$0xff]
        %v333 = vld [vmem:[%s291 + $0x10] sm:$0xff]
        %v334 = vld [vmem:[%s291 + $0x18] sm:$0xff]
        %v335 = vld [vmem:[#allocation2] sm:$0xff]
        %v336 = vld [vmem:[#allocation2 + $0x8] sm:$0xff]
        %v337 = vld [vmem:[#allocation2 + $0x10] sm:$0xff]
        %v338 = vld [vmem:[#allocation2 + $0x18] sm:$0xff]
        %v339 = vld [vmem:[#allocation2 + $0x20] sm:$0xff]
        %v340 = vld [vmem:[#allocation2 + $0x28] sm:$0xff]
        %v341 = vld [vmem:[#allocation2 + $0x30] sm:$0xff]
        %v342 = vld [vmem:[#allocation2 + $0x38] sm:$0xff]
        %v343 = vld [vmem:[#allocation2 + $0x40] sm:$0xff]
        %v344 = vld [vmem:[#allocation2 + $0x48] sm:$0xff]
        %v345 = vld [vmem:[#allocation2 + $0x50] sm:$0xff]
        %v346 = vld [vmem:[#allocation2 + $0x58] sm:$0xff]
        %v347 = vld [vmem:[#allocation2 + $0x60] sm:$0xff]
        %v348 = vld [vmem:[#allocation2 + $0x68] sm:$0xff]
        %v349 = vld [vmem:[#allocation2 + $0x70] sm:$0xff]
        %v350 = vld [vmem:[#allocation2 + $0x78] sm:$0xff]
        %v351 = vld [vmem:[#allocation2 + $0x80] sm:$0xff]
        %v352 = vld [vmem:[#allocation2 + $0x88] sm:$0xff]
        %v353 = vld [vmem:[#allocation2 + $0x90] sm:$0xff]
        %v354 = vld [vmem:[#allocation2 + $0x98] sm:$0xff]
        %v355 = vld [vmem:[#allocation2 + $0xa0] sm:$0xff]
        %v356 = vld [vmem:[#allocation2 + $0xa8] sm:$0xff]
        %v357 = vld [vmem:[#allocation2 + $0xb0] sm:$0xff]
        %v358 = vld [vmem:[#allocation2 + $0xb8] sm:$0xff]
        %v359 = vld [vmem:[#allocation2 + $0xc0] sm:$0xff]
        %v360 = vld [vmem:[#allocation2 + $0xc8] sm:$0xff]
        %v361 = vld [vmem:[#allocation2 + $0xd0] sm:$0xff]
        %v362 = vld [vmem:[#allocation2 + $0xd8] sm:$0xff]
        %v363 = vld [vmem:[#allocation2 + $0xe0] sm:$0xff]
        %v364 = vld [vmem:[#allocation2 + $0xe8] sm:$0xff]
        %v365 = vld [vmem:[#allocation2 + $0xf0] sm:$0xff]
        %v366 = vld [vmem:[#allocation2 + $0xf8] sm:$0xff]
        %v367 = vld [vmem:[#allocation2 + $0x100] sm:$0xff]
        %v368 = vld [vmem:[#allocation2 + $0x108] sm:$0xff]
        %v369 = vld [vmem:[#allocation2 + $0x110] sm:$0xff]
        %v370 = vld [vmem:[#allocation2 + $0x118] sm:$0xff]
        %v371 = vld [vmem:[#allocation2 + $0x120] sm:$0xff]
        %v372 = vld [vmem:[#allocation2 + $0x128] sm:$0xff]
        %v373 = vld [vmem:[#allocation2 + $0x130] sm:$0xff]
        %v374 = vld [vmem:[#allocation2 + $0x138] sm:$0xff]
        %v375 = vld [vmem:[#allocation2 + $0x140] sm:$0xff]
        %v376 = vld [vmem:[#allocation2 + $0x148] sm:$0xff]
        %v377 = vld [vmem:[#allocation2 + $0x150] sm:$0xff]
        %v378 = vld [vmem:[#allocation2 + $0x158] sm:$0xff]
        %v379 = vld [vmem:[#allocation2 + $0x160] sm:$0xff]
        %v380 = vld [vmem:[#allocation2 + $0x168] sm:$0xff]
        %v381 = vld [vmem:[#allocation2 + $0x170] sm:$0xff]
        %v382 = vld [vmem:[#allocation2 + $0x178] sm:$0xff]
        %v383 = vld [vmem:[#allocation2 + $0x180] sm:$0xff]
        %v384 = vld [vmem:[#allocation2 + $0x188] sm:$0xff]
        %v385 = vld [vmem:[#allocation2 + $0x190] sm:$0xff]
        %v386 = vld [vmem:[#allocation2 + $0x198] sm:$0xff]
        %v387 = vld [vmem:[#allocation2 + $0x1a0] sm:$0xff]
        %v388 = vld [vmem:[#allocation2 + $0x1a8] sm:$0xff]
        %v389 = vld [vmem:[#allocation2 + $0x1b0] sm:$0xff]
        %v390 = vld [vmem:[#allocation2 + $0x1b8] sm:$0xff]
        %v391 = vld [vmem:[#allocation2 + $0x1c0] sm:$0xff]
        %v392 = vld [vmem:[#allocation2 + $0x1c8] sm:$0xff]
        %v393 = vld [vmem:[#allocation2 + $0x1d0] sm:$0xff]
        %v394 = vld [vmem:[#allocation2 + $0x1d8] sm:$0xff]
        %v395 = vld [vmem:[#allocation2 + $0x1e0] sm:$0xff]
        %v396 = vld [vmem:[#allocation2 + $0x1e8] sm:$0xff]
        %v397 = vld [vmem:[#allocation2 + $0x1f0] sm:$0xff]
        %v398 = vld [vmem:[#allocation2 + $0x1f8] sm:$0xff]
        %v399 = vld [vmem:[#allocation5] sm:$0xf]
        %v401 = vlaneseq
        %v402 = vshrl.u32 %v401, 7
        %v403 = vsub.s32 0, %v402
        %v404 = vrot.slane %v399, %v403
        %v405 = vlaneseq
        %v406 = vshrl.u32 %v405, 7
        %v407 = vsub.s32 1, %v406
        %v408 = vrot.slane %v399, %v407
        %v409 = vlaneseq
        %v410 = vshrl.u32 %v409, 7
        %v411 = vsub.s32 2, %v410
        %v412 = vrot.slane %v399, %v411
        %v413 = vlaneseq
        %v414 = vshrl.u32 %v413, 7
        %v415 = vsub.s32 3, %v414
        %v416 = vrot.slane %v399, %v415
        %421 = vmatprep.subr.mxu0 %v336
        %422 = vmatpush1.msra.mxu0 %v335
        %423 = vmatprep.subr.mxu0 %v340
        %424 = vmatpush1.msra.mxu0 %v339
        %425 = vmatprep.subr.mxu0 %v344
        %426 = vmatpush1.msra.mxu0 %v343
        %427 = vmatprep.subr.mxu0 %v348
        %428 = vmatpush1.msra.mxu0 %v347
        %429 = vmatprep.subr.mxu0 %v352
        %430 = vmatpush1.msra.mxu0 %v351
        %431 = vmatprep.subr.mxu0 %v356
        %432 = vmatpush1.msra.mxu0 %v355
        %433 = vmatprep.subr.mxu0 %v360
        %434 = vmatpush1.msra.mxu0 %v359
        %435 = vmatprep.subr.mxu0 %v364
        %436 = vmatpush1.msra.mxu0 %v363
        %437 = vmatprep.subr.mxu0 %v368
        %438 = vmatpush1.msra.mxu0 %v367
        %439 = vmatprep.subr.mxu0 %v372
        %440 = vmatpush1.msra.mxu0 %v371
        %441 = vmatprep.subr.mxu0 %v376
        %442 = vmatpush1.msra.mxu0 %v375
        %443 = vmatprep.subr.mxu0 %v380
        %444 = vmatpush1.msra.mxu0 %v379
        %445 = vmatprep.subr.mxu0 %v384
        %446 = vmatpush1.msra.mxu0 %v383
        %447 = vmatprep.subr.mxu0 %v388
        %448 = vmatpush1.msra.mxu0 %v387
        %449 = vmatprep.subr.mxu0 %v392
        %450 = vmatpush1.msra.mxu0 %v391
        %451 = vmatprep.subr.mxu0 %v396
        %452 = vmatpush1.msra.mxu0 %v395
        %453 = vmatprep.subr.mxu0 0.0
        %454 = vmatpush1.msra.mxu0 0.0
        %455 = vmatprep.subr.mxu0 0.0
        %456 = vmatpush1.msra.mxu0 0.0
        %457 = vmatprep.subr.mxu0 0.0
        %458 = vmatpush1.msra.mxu0 0.0
        %459 = vmatprep.subr.mxu0 0.0
        %460 = vmatpush1.msra.mxu0 0.0
        %461 = vmatprep.subr.mxu0 0.0
        %462 = vmatpush1.msra.mxu0 0.0
        %463 = vmatprep.subr.mxu0 0.0
        %464 = vmatpush1.msra.mxu0 0.0
        %465 = vmatprep.subr.mxu0 0.0
        %466 = vmatpush1.msra.mxu0 0.0
        %467 = vmatprep.subr.mxu0 0.0
        %468 = vmatpush1.msra.mxu0 0.0
        %469 = vmatprep.subr.mxu0 0.0
        %470 = vmatpush1.msra.mxu0 0.0
        %471 = vmatprep.subr.mxu0 0.0
        %472 = vmatpush1.msra.mxu0 0.0
        %473 = vmatprep.subr.mxu0 0.0
        %474 = vmatpush1.msra.mxu0 0.0
        %475 = vmatprep.subr.mxu0 0.0
        %476 = vmatpush1.msra.mxu0 0.0
        %477 = vmatprep.subr.mxu0 0.0
        %478 = vmatpush1.msra.mxu0 0.0
        %479 = vmatprep.subr.mxu0 0.0
        %480 = vmatpush1.msra.mxu0 0.0
        %481 = vmatprep.subr.mxu0 0.0
        %482 = vmatpush1.msra.mxu0 0.0
        %483 = vmatprep.subr.mxu0 0.0
        %484 = vmatpush1.msra.mxu0 0.0
        %485 = vmatprep.mubr.f32.mxu0 0.0
        %486 = vmatmul.mubr.f32.gmra.mrb[0].mxu0 %v331
        %v487 = vpop.f32.mrb[0].mxu0
        %v488 = vadd.f32 %v404, %v487
        %v489 = vpop.f32.mrb[0].mxu0
        %v490 = vadd.f32 %v408, %v489
        %491 = vmatprep.mubr.f32.mxu0 0.0
        %492 = vmatmul.mubr.f32.gmra.mrb[0].mxu0 %v333
        %v493 = vpop.f32.mrb[0].mxu0
        %v494 = vadd.f32 %v404, %v493
        %v495 = vpop.f32.mrb[0].mxu0
        %v496 = vadd.f32 %v408, %v495
        %497 = vdwg.mxu0
        %498 = vmatprep.subr.mxu0 %v338
        %499 = vmatpush1.msra.mxu0 %v337
        %500 = vmatprep.subr.mxu0 %v342
        %501 = vmatpush1.msra.mxu0 %v341
        %502 = vmatprep.subr.mxu0 %v346
        %503 = vmatpush1.msra.mxu0 %v345
        %504 = vmatprep.subr.mxu0 %v350
        %505 = vmatpush1.msra.mxu0 %v349
        %506 = vmatprep.subr.mxu0 %v354
        %507 = vmatpush1.msra.mxu0 %v353
        %508 = vmatprep.subr.mxu0 %v358
        %509 = vmatpush1.msra.mxu0 %v357
        %510 = vmatprep.subr.mxu0 %v362
        %511 = vmatpush1.msra.mxu0 %v361
        %512 = vmatprep.subr.mxu0 %v366
        %513 = vmatpush1.msra.mxu0 %v365
        %514 = vmatprep.subr.mxu0 %v370
        %515 = vmatpush1.msra.mxu0 %v369
        %516 = vmatprep.subr.mxu0 %v374
        %517 = vmatpush1.msra.mxu0 %v373
        %518 = vmatprep.subr.mxu0 %v378
        %519 = vmatpush1.msra.mxu0 %v377
        %520 = vmatprep.subr.mxu0 %v382
        %521 = vmatpush1.msra.mxu0 %v381
        %522 = vmatprep.subr.mxu0 %v386
        %523 = vmatpush1.msra.mxu0 %v385
        %524 = vmatprep.subr.mxu0 %v390
        %525 = vmatpush1.msra.mxu0 %v389
        %526 = vmatprep.subr.mxu0 %v394
        %527 = vmatpush1.msra.mxu0 %v393
        %528 = vmatprep.subr.mxu0 %v398
        %529 = vmatpush1.msra.mxu0 %v397
        %530 = vmatprep.subr.mxu0 0.0
        %531 = vmatpush1.msra.mxu0 0.0
        %532 = vmatprep.subr.mxu0 0.0
        %533 = vmatpush1.msra.mxu0 0.0
        %534 = vmatprep.subr.mxu0 0.0
        %535 = vmatpush1.msra.mxu0 0.0
        %536 = vmatprep.subr.mxu0 0.0
        %537 = vmatpush1.msra.mxu0 0.0
        %538 = vmatprep.subr.mxu0 0.0
        %539 = vmatpush1.msra.mxu0 0.0
        %540 = vmatprep.subr.mxu0 0.0
        %541 = vmatpush1.msra.mxu0 0.0
        %542 = vmatprep.subr.mxu0 0.0
        %543 = vmatpush1.msra.mxu0 0.0
        %544 = vmatprep.subr.mxu0 0.0
        %545 = vmatpush1.msra.mxu0 0.0
        %546 = vmatprep.subr.mxu0 0.0
        %547 = vmatpush1.msra.mxu0 0.0
        %548 = vmatprep.subr.mxu0 0.0
        %549 = vmatpush1.msra.mxu0 0.0
        %550 = vmatprep.subr.mxu0 0.0
        %551 = vmatpush1.msra.mxu0 0.0
        %552 = vmatprep.subr.mxu0 0.0
        %553 = vmatpush1.msra.mxu0 0.0
        %554 = vmatprep.subr.mxu0 0.0
        %555 = vmatpush1.msra.mxu0 0.0
        %556 = vmatprep.subr.mxu0 0.0
        %557 = vmatpush1.msra.mxu0 0.0
        %558 = vmatprep.subr.mxu0 0.0
        %559 = vmatpush1.msra.mxu0 0.0
        %560 = vmatprep.subr.mxu0 0.0
        %561 = vmatpush1.msra.mxu0 0.0
        %562 = vmatprep.mubr.f32.mxu0 0.0
        %563 = vmatmul.mubr.f32.gmra.mrb[0].mxu0 %v331
        %v564 = vpop.f32.mrb[0].mxu0
        %v565 = vadd.f32 %v412, %v564
        %v566 = vpop.f32.mrb[0].mxu0
        %v567 = vadd.f32 %v416, %v566
        %568 = vmatprep.mubr.f32.mxu0 0.0
        %569 = vmatmul.mubr.f32.gmra.mrb[0].mxu0 %v333
        %v570 = vpop.f32.mrb[0].mxu0
        %v571 = vadd.f32 %v412, %v570
        %v572 = vpop.f32.mrb[0].mxu0
        %v573 = vadd.f32 %v416, %v572
        %574 = vdwg.mxu0
        %v575 = vmul.f32 %v332, 1.442695
        %v576 = vpow.pop %v575
        %v577 = vmul.f32 %v334, 1.442695
        %v578 = vpow.pop %v577
        %581 = vrot.lane.b32.xlu0 %v576, 8
        %v582 = vpop.permute.xlu0 %581
        %583 = vrot.lane.b32.xlu0 %v578, 8
        %v584 = vpop.permute.xlu0 %583
        %vm587 = vcmask 64512
        %v588 = vsel %vm587, %v576, %v582
        %v589 = vsel %vm587, %v578, %v584
        %592 = vrot.lane.b32.xlu0 %v588, 16
        %v593 = vpop.permute.xlu0 %592
        %594 = vrot.lane.b32.xlu0 %v589, 16
        %v595 = vpop.permute.xlu0 %594
        %vm598 = vcmask 130048
        %v599 = vsel %vm598, %v588, %v593
        %v600 = vsel %vm598, %v589, %v595
        %603 = vrot.lane.b32.xlu0 %v599, 32
        %v604 = vpop.permute.xlu0 %603
        %605 = vrot.lane.b32.xlu0 %v600, 32
        %v606 = vpop.permute.xlu0 %605
        %vm609 = vcmask 261120
        %v610 = vsel %vm609, %v599, %v604
        %v611 = vsel %vm609, %v600, %v606
        %614 = vrot.lane.b32.xlu0 %v610, 64
        %v615 = vpop.permute.xlu0 %614
        %616 = vrot.lane.b32.xlu0 %v611, 64
        %v617 = vpop.permute.xlu0 %616
        %vm620 = vcmask 523264
        %v621 = vsel %vm620, %v610, %v615
        %v622 = vsel %vm620, %v611, %v617
        %v623 = vld [vmem:[%s3] sm:$0x1]
        %v625 = vlaneseq
        %v626 = vshrl.u32 %v625, 7
        %v627 = vsub.s32 0, %v626
        %v628 = vrot.slane %v623, %v627
        %v630 = vmul.f32 %v331, %v628
        %v631 = vmul.f32 %v333, %v628
        %v632 = vld [vmem:[%s4] sm:$0x1]
        %v634 = vlaneseq
        %v635 = vshrl.u32 %v634, 7
        %v636 = vsub.s32 0, %v635
        %v637 = vrot.slane %v632, %v636
        %v639 = vmul.f32 %v637, %v621
        %v640 = vmul.f32 %v637, %v622
        %v641 = vadd.f32 %v630, %v639
        %v642 = vadd.f32 %v631, %v640
        %v643 = vld [vmem:[#allocation7] sm:$0xff]
        %v644 = vld [vmem:[#allocation7 + $0x8] sm:$0xff]
        %v645 = vld [vmem:[#allocation7 + $0x10] sm:$0xff]
        %v646 = vld [vmem:[#allocation7 + $0x18] sm:$0xff]
        %v647 = vld [vmem:[#allocation7 + $0x20] sm:$0xff]
        %v648 = vld [vmem:[#allocation7 + $0x28] sm:$0xff]
        %v649 = vld [vmem:[#allocation7 + $0x30] sm:$0xff]
        %v650 = vld [vmem:[#allocation7 + $0x38] sm:$0xff]
        %v651 = vld [vmem:[#allocation7 + $0x40] sm:$0xff]
        %v652 = vld [vmem:[#allocation7 + $0x48] sm:$0xff]
        %v653 = vld [vmem:[#allocation7 + $0x50] sm:$0xff]
        %v654 = vld [vmem:[#allocation7 + $0x58] sm:$0xff]
        %v655 = vld [vmem:[#allocation7 + $0x60] sm:$0xff]
        %v656 = vld [vmem:[#allocation7 + $0x68] sm:$0xff]
        %v657 = vld [vmem:[#allocation7 + $0x70] sm:$0xff]
        %v658 = vld [vmem:[#allocation7 + $0x78] sm:$0xff]
        %v659 = vld [vmem:[#allocation7 + $0x80] sm:$0xff]
        %v660 = vld [vmem:[#allocation7 + $0x88] sm:$0xff]
        %v661 = vld [vmem:[#allocation7 + $0x90] sm:$0xff]
        %v662 = vld [vmem:[#allocation7 + $0x98] sm:$0xff]
        %v663 = vld [vmem:[#allocation7 + $0xa0] sm:$0xff]
        %v664 = vld [vmem:[#allocation7 + $0xa8] sm:$0xff]
        %v665 = vld [vmem:[#allocation7 + $0xb0] sm:$0xff]
        %v666 = vld [vmem:[#allocation7 + $0xb8] sm:$0xff]
        %v667 = vld [vmem:[#allocation7 + $0xc0] sm:$0xff]
        %v668 = vld [vmem:[#allocation7 + $0xc8] sm:$0xff]
        %v669 = vld [vmem:[#allocation7 + $0xd0] sm:$0xff]
        %v670 = vld [vmem:[#allocation7 + $0xd8] sm:$0xff]
        %v671 = vld [vmem:[#allocation7 + $0xe0] sm:$0xff]
        %v672 = vld [vmem:[#allocation7 + $0xe8] sm:$0xff]
        %v673 = vld [vmem:[#allocation7 + $0xf0] sm:$0xff]
        %v674 = vld [vmem:[#allocation7 + $0xf8] sm:$0xff]
        %v675 = vld [vmem:[#allocation7 + $0x100] sm:$0xff]
        %v676 = vld [vmem:[#allocation7 + $0x108] sm:$0xff]
        %v677 = vld [vmem:[#allocation7 + $0x110] sm:$0xff]
        %v678 = vld [vmem:[#allocation7 + $0x118] sm:$0xff]
        %v679 = vld [vmem:[#allocation7 + $0x120] sm:$0xff]
        %v680 = vld [vmem:[#allocation7 + $0x128] sm:$0xff]
        %v681 = vld [vmem:[#allocation7 + $0x130] sm:$0xff]
        %v682 = vld [vmem:[#allocation7 + $0x138] sm:$0xff]
        %v683 = vld [vmem:[#allocation7 + $0x140] sm:$0xff]
        %v684 = vld [vmem:[#allocation7 + $0x148] sm:$0xff]
        %v685 = vld [vmem:[#allocation7 + $0x150] sm:$0xff]
        %v686 = vld [vmem:[#allocation7 + $0x158] sm:$0xff]
        %v687 = vld [vmem:[#allocation7 + $0x160] sm:$0xff]
        %v688 = vld [vmem:[#allocation7 + $0x168] sm:$0xff]
        %v689 = vld [vmem:[#allocation7 + $0x170] sm:$0xff]
        %v690 = vld [vmem:[#allocation7 + $0x178] sm:$0xff]
        %v691 = vld [vmem:[#allocation7 + $0x180] sm:$0xff]
        %v692 = vld [vmem:[#allocation7 + $0x188] sm:$0xff]
        %v693 = vld [vmem:[#allocation7 + $0x190] sm:$0xff]
        %v694 = vld [vmem:[#allocation7 + $0x198] sm:$0xff]
        %v695 = vld [vmem:[#allocation7 + $0x1a0] sm:$0xff]
        %v696 = vld [vmem:[#allocation7 + $0x1a8] sm:$0xff]
        %v697 = vld [vmem:[#allocation7 + $0x1b0] sm:$0xff]
        %v698 = vld [vmem:[#allocation7 + $0x1b8] sm:$0xff]
        %v699 = vld [vmem:[#allocation7 + $0x1c0] sm:$0xff]
        %v700 = vld [vmem:[#allocation7 + $0x1c8] sm:$0xff]
        %v701 = vld [vmem:[#allocation7 + $0x1d0] sm:$0xff]
        %v702 = vld [vmem:[#allocation7 + $0x1d8] sm:$0xff]
        %v703 = vld [vmem:[#allocation7 + $0x1e0] sm:$0xff]
        %v704 = vld [vmem:[#allocation7 + $0x1e8] sm:$0xff]
        %v705 = vld [vmem:[#allocation7 + $0x1f0] sm:$0xff]
        %v706 = vld [vmem:[#allocation7 + $0x1f8] sm:$0xff]
        %707 = vmatprep.subr.mxu0 %v644
        %708 = vmatpush1.msra.mxu0 %v643
        %709 = vmatprep.subr.mxu0 %v648
        %710 = vmatpush1.msra.mxu0 %v647
        %711 = vmatprep.subr.mxu0 %v652
        %712 = vmatpush1.msra.mxu0 %v651
        %713 = vmatprep.subr.mxu0 %v656
        %714 = vmatpush1.msra.mxu0 %v655
        %715 = vmatprep.subr.mxu0 %v660
        %716 = vmatpush1.msra.mxu0 %v659
        %717 = vmatprep.subr.mxu0 %v664
        %718 = vmatpush1.msra.mxu0 %v663
        %719 = vmatprep.subr.mxu0 %v668
        %720 = vmatpush1.msra.mxu0 %v667
        %721 = vmatprep.subr.mxu0 %v672
        %722 = vmatpush1.msra.mxu0 %v671
        %723 = vmatprep.subr.mxu0 %v676
        %724 = vmatpush1.msra.mxu0 %v675
        %725 = vmatprep.subr.mxu0 %v680
        %726 = vmatpush1.msra.mxu0 %v679
        %727 = vmatprep.subr.mxu0 %v684
        %728 = vmatpush1.msra.mxu0 %v683
        %729 = vmatprep.subr.mxu0 %v688
        %730 = vmatpush1.msra.mxu0 %v687
        %731 = vmatprep.subr.mxu0 %v692
        %732 = vmatpush1.msra.mxu0 %v691
        %733 = vmatprep.subr.mxu0 %v696
        %734 = vmatpush1.msra.mxu0 %v695
        %735 = vmatprep.subr.mxu0 %v700
        %736 = vmatpush1.msra.mxu0 %v699
        %737 = vmatprep.subr.mxu0 %v704
        %738 = vmatpush1.msra.mxu0 %v703
        %739 = vmatprep.subr.mxu0 0.0
        %740 = vmatpush1.msra.mxu0 0.0
        %741 = vmatprep.subr.mxu0 0.0
        %742 = vmatpush1.msra.mxu0 0.0
        %743 = vmatprep.subr.mxu0 0.0
        %744 = vmatpush1.msra.mxu0 0.0
        %745 = vmatprep.subr.mxu0 0.0
        %746 = vmatpush1.msra.mxu0 0.0
        %747 = vmatprep.subr.mxu0 0.0
        %748 = vmatpush1.msra.mxu0 0.0
        %749 = vmatprep.subr.mxu0 0.0
        %750 = vmatpush1.msra.mxu0 0.0
        %751 = vmatprep.subr.mxu0 0.0
        %752 = vmatpush1.msra.mxu0 0.0
        %753 = vmatprep.subr.mxu0 0.0
        %754 = vmatpush1.msra.mxu0 0.0
        %755 = vmatprep.subr.mxu0 0.0
        %756 = vmatpush1.msra.mxu0 0.0
        %757 = vmatprep.subr.mxu0 0.0
        %758 = vmatpush1.msra.mxu0 0.0
        %759 = vmatprep.subr.mxu0 0.0
        %760 = vmatpush1.msra.mxu0 0.0
        %761 = vmatprep.subr.mxu0 0.0
        %762 = vmatpush1.msra.mxu0 0.0
        %763 = vmatprep.subr.mxu0 0.0
        %764 = vmatpush1.msra.mxu0 0.0
        %765 = vmatprep.subr.mxu0 0.0
        %766 = vmatpush1.msra.mxu0 0.0
        %767 = vmatprep.subr.mxu0 0.0
        %768 = vmatpush1.msra.mxu0 0.0
        %769 = vmatprep.subr.mxu0 0.0
        %770 = vmatpush1.msra.mxu0 0.0
        %771 = vmatprep.mubr.f32.mxu0 0.0
        %772 = vmatmul.mubr.f32.gmra.mrb[0].mxu0 %v641
        %v773 = vpop.f32.mrb[0].mxu0
        %v774 = vadd.f32 0.0, %v773
        %v775 = vpop.f32.mrb[0].mxu0
        %v776 = vadd.f32 0.0, %v775
        %777 = vmatprep.mubr.f32.mxu0 0.0
        %778 = vmatmul.mubr.f32.gmra.mrb[0].mxu0 %v642
        %v779 = vpop.f32.mrb[0].mxu0
        %v780 = vadd.f32 0.0, %v779
        %v781 = vpop.f32.mrb[0].mxu0
        %v782 = vadd.f32 0.0, %v781
        %783 = vdwg.mxu0
        %784 = vmatprep.subr.mxu0 %v646
        %785 = vmatpush1.msra.mxu0 %v645
        %786 = vmatprep.subr.mxu0 %v650
        %787 = vmatpush1.msra.mxu0 %v649
        %788 = vmatprep.subr.mxu0 %v654
        %789 = vmatpush1.msra.mxu0 %v653
        %790 = vmatprep.subr.mxu0 %v658
        %791 = vmatpush1.msra.mxu0 %v657
        %792 = vmatprep.subr.mxu0 %v662
        %793 = vmatpush1.msra.mxu0 %v661
        %794 = vmatprep.subr.mxu0 %v666
        %795 = vmatpush1.msra.mxu0 %v665
        %796 = vmatprep.subr.mxu0 %v670
        %797 = vmatpush1.msra.mxu0 %v669
        %798 = vmatprep.subr.mxu0 %v674
        %799 = vmatpush1.msra.mxu0 %v673
        %800 = vmatprep.subr.mxu0 %v678
        %801 = vmatpush1.msra.mxu0 %v677
        %802 = vmatprep.subr.mxu0 %v682
        %803 = vmatpush1.msra.mxu0 %v681
        %804 = vmatprep.subr.mxu0 %v686
        %805 = vmatpush1.msra.mxu0 %v685
        %806 = vmatprep.subr.mxu0 %v690
        %807 = vmatpush1.msra.mxu0 %v689
        %808 = vmatprep.subr.mxu0 %v694
        %809 = vmatpush1.msra.mxu0 %v693
        %810 = vmatprep.subr.mxu0 %v698
        %811 = vmatpush1.msra.mxu0 %v697
        %812 = vmatprep.subr.mxu0 %v702
        %813 = vmatpush1.msra.mxu0 %v701
        %814 = vmatprep.subr.mxu0 %v706
        %815 = vmatpush1.msra.mxu0 %v705
        %816 = vmatprep.subr.mxu0 0.0
        %817 = vmatpush1.msra.mxu0 0.0
        %818 = vmatprep.subr.mxu0 0.0
        %819 = vmatpush1.msra.mxu0 0.0
        %820 = vmatprep.subr.mxu0 0.0
        %821 = vmatpush1.msra.mxu0 0.0
        %822 = vmatprep.subr.mxu0 0.0
        %823 = vmatpush1.msra.mxu0 0.0
        %824 = vmatprep.subr.mxu0 0.0
        %825 = vmatpush1.msra.mxu0 0.0
        %826 = vmatprep.subr.mxu0 0.0
        %827 = vmatpush1.msra.mxu0 0.0
        %828 = vmatprep.subr.mxu0 0.0
        %829 = vmatpush1.msra.mxu0 0.0
        %830 = vmatprep.subr.mxu0 0.0
        %831 = vmatpush1.msra.mxu0 0.0
        %832 = vmatprep.subr.mxu0 0.0
        %833 = vmatpush1.msra.mxu0 0.0
        %834 = vmatprep.subr.mxu0 0.0
        %835 = vmatpush1.msra.mxu0 0.0
        %836 = vmatprep.subr.mxu0 0.0
        %837 = vmatpush1.msra.mxu0 0.0
        %838 = vmatprep.subr.mxu0 0.0
        %839 = vmatpush1.msra.mxu0 0.0
        %840 = vmatprep.subr.mxu0 0.0
        %841 = vmatpush1.msra.mxu0 0.0
        %842 = vmatprep.subr.mxu0 0.0
        %843 = vmatpush1.msra.mxu0 0.0
        %844 = vmatprep.subr.mxu0 0.0
        %845 = vmatpush1.msra.mxu0 0.0
        %846 = vmatprep.subr.mxu0 0.0
        %847 = vmatpush1.msra.mxu0 0.0
        %848 = vmatprep.mubr.f32.mxu0 0.0
        %849 = vmatmul.mubr.f32.gmra.mrb[0].mxu0 %v641
        %v850 = vpop.f32.mrb[0].mxu0
        %v851 = vadd.f32 0.0, %v850
        %v852 = vpop.f32.mrb[0].mxu0
        %v853 = vadd.f32 0.0, %v852
        %854 = vmatprep.mubr.f32.mxu0 0.0
        %855 = vmatmul.mubr.f32.gmra.mrb[0].mxu0 %v642
        %v856 = vpop.f32.mrb[0].mxu0
        %v857 = vadd.f32 0.0, %v856
        %v858 = vpop.f32.mrb[0].mxu0
        %v859 = vadd.f32 0.0, %v858
        %860 = vdwg.mxu0
        %v861 = vmul.f32 %v488, %v774
        %v862 = vmul.f32 %v490, %v776
        %v863 = vmul.f32 %v565, %v851
        %v864 = vmul.f32 %v567, %v853
        %v865 = vmul.f32 %v494, %v780
        %v866 = vmul.f32 %v496, %v782
        %v867 = vmul.f32 %v571, %v857
        %v868 = vmul.f32 %v573, %v859
        %v869 = vadd.f32 %v861, %v863
        %v870 = vadd.f32 %v862, %v864
        %v871 = vadd.f32 %v865, %v867
        %v872 = vadd.f32 %v866, %v868
        %v873 = vadd.f32 %v869, %v870
        %v874 = vadd.f32 %v871, %v872
        %877 = vrot.lane.b32.xlu0 %v873, 64
        %v878 = vpop.permute.xlu0 %877
        %879 = vrot.lane.b32.xlu0 %v874, 64
        %v880 = vpop.permute.xlu0 %879
        %v883 = vadd.f32 %v873, %v878
        %v884 = vadd.f32 %v874, %v880
        %885 = vst.msk [vmem:[%s319] sm:$0xff] %vm620, %v883
        %886 = vst.msk [vmem:[%s319 + $0x8] sm:$0xff] %vm620, %v884
        %s887 = sand.u32 %s164, 1
        %s888 = scalar_lea.sflag [#allocation4], %s887
        %s889 = sand.u32 %s164, 1
        %s890 = smul.addr %s889, 16
        %s891 = scalar_lea.vmem [#allocation10], %s890
        // Predicated region
        $region61: #{tpu_custom_call.1} parent=43 // pred_check
          %p892 = pneg %p174
        $region62: #{tpu_custom_call.1} parent=43 // pred_check_branch
          %894 = sbr.rel (%p892) target = $region64
        $region63: #{tpu_custom_call.1} parent=43 // pred_region
          %s895 = smul.u32 2, %s25
          %s896 = ssub.s32 5, %s895
          %p897 = scmp.lt.s32.totalorder %s896, 2
          %s898 = scalar_select %p897, %s896, 2
          %s899 = smul.u32 128, %s898
          %s901 = ssub.s32 256, %s899
          %902 = vsyncadd %s888, %s901
          %p903 = scmp.ne.s32.totalorder 0, %s899
          %s904 = smul.addr %s895, 128
          %s905 = scalar_lea.hbm %s6, %s904
          %s906 = smul.u32 8, %s898
          %s907 = sshll.u32 %s891, 4
          %s908 = int_to_ptr.vmem [resolvable:$true] %s907
          %s909 = sshll.u32 %s906, 4
          %913 = dma.vmem_to_hbm [thread:$0]  (%p903), %s908, %s909, %s905, %s888, 128, 128, 8
        $region64: #{tpu_custom_call.1} parent=43 // pred_fallthru
          _
      $region44: #{tpu_custom_call.1} parent=5 // pred_fallthru
        _
      %p914 = scmp.le.s32.totalorder 2, %s20
      // Predicated region
      $region65: #{tpu_custom_call.1} parent=5 // pred_check
        %p915 = pneg %p914
      $region66: #{tpu_custom_call.1} parent=5 // pred_check_branch
        %917 = sbr.rel (%p915) target = $region68
      $region67: #{tpu_custom_call.1} parent=5 // pred_region
        %s918 = ssub.s32 %s20, 2
        // Predicated region
        $region69: #{tpu_custom_call.1} parent=67 // pred_check
          %p919 = pneg %p180
        $region70: #{tpu_custom_call.1} parent=67 // pred_check_branch
          %921 = sbr.rel (%p919) target = $region72
        $region71: #{tpu_custom_call.1} parent=67 // pred_region
          %s922 = sand.u32 %s165, 1
          %s923 = scalar_lea.sflag [#allocation4], %s922
          %s924 = sand.u32 %s165, 1
          %s925 = smul.addr %s924, 16
          %s926 = scalar_lea.vmem [#allocation10], %s925
          %927 = dma.done %s923, 256
        $region72: #{tpu_custom_call.1} parent=67 // pred_fallthru
          _
      $region68: #{tpu_custom_call.1} parent=5 // pred_fallthru
        _
    $region6: #{tpu_custom_call.1} parent=1 // loop_footer
      %s24 = sadd.s32 1, %s20
    $region7: #{tpu_custom_call.1} parent=1 // loop_footer_branch
      %19 = sbr.rel target = $region3
    $region8: #{tpu_custom_call.1} parent=1 // loop_exit
      _
    %928 = vsyncpa [#allocation3], 1
    %s929 = scalar_lea.sflag [#allocation3], 1
    %930 = vsyncpa %s929, 1
    %931 = vsyncpa [#allocation6], 1
    %932 = vsyncpa [#allocation9], 1
    %s933 = scalar_lea.sflag [#allocation9], 1
    %934 = vsyncpa %s933, 1
    %935 = vsyncpa [#allocation4], 1
    %s936 = scalar_lea.sflag [#allocation4], 1
    %937 = vsyncpa %s936, 1

</llo_original>
